<compile_context>
chip_gen: v5e
topology: v5e:2x2
jax: 0.10.0
libtpu: 0.0.40
codegen_flags: <defaults>
</compile_context>

<pallas_src>
import jax
import jax.numpy as jnp
from jax.experimental import pallas as pl
from jax.experimental.pallas import tpu as pltpu


def _round_up(x, m):
    return ((x + m - 1) // m) * m


def _cdiv(a, b):
    return (a + b - 1) // b


def _sage_kernel(graph_ref, h_ref, root_ref, out_ref, acc_ref):
    # graph_ref: (tm, tk)    adjacency tile, bf16/int8/f32 with 0/1 entries
    # h_ref:     (tk, Fo_p)  bf16 pre-linear features  h = x @ Wl^T
    # root_ref:  (tm, Fo_p)  f32  root term            x[:M] @ Wr^T + bl
    # out_ref:   (tm, Fo_p)
    # acc_ref:   (tm, Fo_p)  f32 scratch, accumulates over the N (k) axis
    k = pl.program_id(1)

    @pl.when(k == 0)
    def _():
        acc_ref[...] = root_ref[...]

    g = graph_ref[...]
    if g.dtype != jnp.bfloat16:
        # 0/1 entries are exact in bf16; narrow/widen stays in-regs, MXU runs
        # at the native bf16 rate on every generation (incl. v7x, no int MXU).
        g = g.astype(jnp.bfloat16)
    acc_ref[...] += jnp.dot(g, h_ref[...], preferred_element_type=jnp.float32)

    @pl.when(k == pl.num_programs(1) - 1)
    def _():
        out_ref[...] = acc_ref[...].astype(out_ref.dtype)


def sage_conv(x, graph, wl, bl, wr, *, tm=512, tk=4096):
    """SAGEConv forward (concat=False, normalize=False).

    x:     [N, Fin]   node features
    graph: [M, N]     dense adjacency with 0/1 entries, M <= N.  Passing it
                      already in bf16 (or int8) and tile-aligned makes the
                      kernel stream it zero-copy.  Non-0/1 edge weights would
                      lose precision in the bf16 path.
    wl:    [Fout, Fin] lin_l weight (PyTorch Linear layout), bl: [Fout] bias
    wr:    [Fout, Fin] lin_r weight
    returns [M, Fout] in x.dtype
    """
    N, fin = x.shape
    M, n_cols = graph.shape
    assert n_cols == N
    assert M <= N, "SAGEConv root term uses x[:M]; requires M <= N"
    fout, fin_l = wl.shape
    assert fin_l == fin and wr.shape == (fout, fin) and bl.shape == (fout,)

    fout_p = _round_up(fout, 128)          # lane-dense output / accumulator
    m_aligned = _round_up(M, 128)
    n_aligned = _round_up(N, 128)

    # --- tile selection ------------------------------------------------------
    tm = min(tm, m_aligned)
    if m_aligned >= 256:                   # keep >=2 M-blocks for v7x megacore
        tm = min(tm, (m_aligned // 2) // 128 * 128)
    m_blocks = _cdiv(m_aligned, tm)
    tm = _round_up(_cdiv(m_aligned, m_blocks), 128)   # balance, minimize pad
    m_p = m_blocks * tm

    tk = min(tk, n_aligned)
    n_blocks = _cdiv(n_aligned, tk)
    tk = _round_up(_cdiv(n_aligned, n_blocks), 128)
    n_p = n_blocks * tk

    # --- operands (small XLA-side precompute; reassociated math) --------------
    f32 = jnp.float32
    x32 = x.astype(f32)

    # h = x @ Wl^T, streamed as bf16 so the in-kernel dot is bf16 x bf16.
    h = jnp.dot(x32, wl.T.astype(f32))                        # [N, Fout] f32
    h_p = jnp.zeros((n_p, fout_p), jnp.bfloat16).at[:N, :fout].set(
        h.astype(jnp.bfloat16))

    # root = x[:M] @ Wr^T + bl, kept in f32 (it seeds the accumulator).
    root = jnp.dot(x32[:M], wr.T.astype(f32)) + bl.astype(f32)  # [M, Fout]
    root_p = jnp.zeros((m_p, fout_p), f32).at[:M, :fout].set(root)

    # Adjacency: zero-copy when already tile-aligned; otherwise pad once
    # (cast to bf16 so the padded copy stays narrow).
    if graph.shape == (m_p, n_p):
        g_in = graph
    else:
        g_in = jnp.zeros((m_p, n_p), jnp.bfloat16).at[:M, :N].set(
            graph.astype(jnp.bfloat16))

    # --- VMEM budget -----------------------------------------------------------
    g_itemsize = jnp.dtype(g_in.dtype).itemsize
    out_itemsize = jnp.dtype(x.dtype).itemsize
    vmem_need = (2 * (tm * tk * g_itemsize            # adjacency (2 buffers)
                      + tk * fout_p * 2               # h (bf16)
                      + tm * fout_p * 4               # root (f32)
                      + tm * fout_p * out_itemsize)   # out
                 + tm * fout_p * 4)                   # acc scratch
    vmem_limit = int(min(max(vmem_need + vmem_need // 2 + (4 << 20), 32 << 20),
                         56 << 20))

    grid = (m_p // tm, n_p // tk)

    out_p = pl.pallas_call(
        _sage_kernel,
        out_shape=jax.ShapeDtypeStruct((m_p, fout_p), x.dtype),
        grid_spec=pltpu.PrefetchScalarGridSpec(
            num_scalar_prefetch=0,
            grid=grid,
            in_specs=[
                pl.BlockSpec((tm, tk), lambda i, k: (i, k)),       # adjacency
                pl.BlockSpec((tk, fout_p), lambda i, k: (k, 0)),   # h
                pl.BlockSpec((tm, fout_p), lambda i, k: (i, 0)),   # root
            ],
            out_specs=pl.BlockSpec((tm, fout_p), lambda i, k: (i, 0)),
            scratch_shapes=[pltpu.VMEM((tm, fout_p), jnp.float32)],
        ),
        compiler_params=pltpu.CompilerParams(
            dimension_semantics=("parallel", "arbitrary"),
            vmem_limit_bytes=vmem_limit),
    )(g_in, h_p, root_p)

    return out_p[:M, :fout]


def _glorot(key, shape):
    # PyTorch-geometric style glorot uniform: U(-a, a), a = sqrt(6/(fan_in+fan_out))
    fan_out, fan_in = shape
    a = jnp.sqrt(6.0 / (fan_in + fan_out))
    return jax.random.uniform(key, shape, jnp.float32, minval=-a, maxval=a)


if __name__ == "__main__":
    key = jax.random.PRNGKey(0)
    k_x, k_g, k_wl, k_wr, k_b = jax.random.split(key, 5)

    N = 512                  # number of nodes (M == N)
    in_channels = 64
    out_channels = 64

    x = jax.random.normal(k_x, (N, in_channels), jnp.float32)
    # 0/1 adjacency, built directly in bf16 (exact for 0/1) so the kernel
    # streams it zero-copy: no wrapper-side cast+pad of the dominant stream.
    graph = (jax.random.uniform(k_g, (N, N), jnp.float32) > 0.8).astype(
        jnp.bfloat16)

    wl = _glorot(k_wl, (out_channels, in_channels))
    wr = _glorot(k_wr, (out_channels, in_channels))
    # reset_parameters() zeros the bias; use a small non-zero bias so the bias
    # path is actually exercised (any value is valid module state).
    bl = 0.01 * jax.random.normal(k_b, (out_channels,), jnp.float32)

    out = sage_conv(x, graph, wl, bl, wr)
    out = jax.block_until_ready(out)

    # Reference in plain JAX, f32 throughout (same math as the PyTorch module).
    g32 = graph.astype(jnp.float32)
    ref = (g32 @ x) @ wl.T + bl + x @ wr.T
    assert out.shape == (N, out_channels)

    # h is streamed as bf16 (~0.4% relative quantization on the aggregated
    # term, errors largely cancel over ~100 neighbors); check against the f32
    # reference with a matching tolerance.
    err = float(jnp.max(jnp.abs(out - ref)))
    scale = float(jnp.max(jnp.abs(ref)))
    assert err <= 1e-2 * scale + 1e-1, (err, scale)

    print("KERNEL_OK")
</pallas_src>

<mosaic_0001>
module attributes {stable_mosaic.version = 11 : i64} {
  func.func @_sage_kernel(%arg0: i32, %arg1: i32, %arg2: memref<256x512xbf16, #tpu.memory_space<vmem>>, %arg3: memref<512x128xbf16, #tpu.memory_space<vmem>>, %arg4: memref<256x128xf32, #tpu.memory_space<vmem>>, %arg5: memref<256x128xf32, #tpu.memory_space<vmem>>, %arg6: memref<256x128xf32, #tpu.memory_space<vmem>>) attributes {dimension_semantics = [#tpu.dimension_semantics<parallel>, #tpu.dimension_semantics<arbitrary>], iteration_bounds = array<i64: 2, 1>, scalar_prefetch = 0 : i64, scratch_operands = 1 : i64, tpu.core_type = #tpu.core_type<tc>, window_params = [{transform_indices = @transform_0, window_bounds = array<i64: 256, 512>}, {transform_indices = @transform_1, window_bounds = array<i64: 512, 128>}, {transform_indices = @transform_2, window_bounds = array<i64: 256, 128>}, {transform_indices = @transform_3, window_bounds = array<i64: 256, 128>}]} {
    %c0_i32 = arith.constant 0 : i32
    %0 = arith.cmpi eq, %arg1, %c0_i32 : i32
    %1 = arith.extui %0 : i1 to i32
    %c0_i32_0 = arith.constant 0 : i32
    %2 = arith.cmpi ne, %1, %c0_i32_0 : i32
    scf.if %2 {
      %c0_10 = arith.constant 0 : index
      %c0_11 = arith.constant 0 : index
      %12 = vector.load %arg4[%c0_10, %c0_11] : memref<256x128xf32, #tpu.memory_space<vmem>>, vector<256x128xf32>
      %c0_12 = arith.constant 0 : index
      %c0_13 = arith.constant 0 : index
      %13 = vector.load %arg6[%c0_12, %c0_13] : memref<256x128xf32, #tpu.memory_space<vmem>>, vector<256x128xf32>
      tpu.vector_store %arg6[%c0_12, %c0_13], %12 {strides = array<i32>} : memref<256x128xf32, #tpu.memory_space<vmem>>, vector<256x128xf32>,
    } else {
    }
    %c0 = arith.constant 0 : index
    %c0_1 = arith.constant 0 : index
    %3 = vector.load %arg2[%c0, %c0_1] : memref<256x512xbf16, #tpu.memory_space<vmem>>, vector<256x512xbf16>
    %c0_2 = arith.constant 0 : index
    %c0_3 = arith.constant 0 : index
    %4 = vector.load %arg6[%c0_2, %c0_3] : memref<256x128xf32, #tpu.memory_space<vmem>>, vector<256x128xf32>
    %c0_4 = arith.constant 0 : index
    %c0_5 = arith.constant 0 : index
    %5 = vector.load %arg3[%c0_4, %c0_5] : memref<512x128xbf16, #tpu.memory_space<vmem>>, vector<512x128xbf16>
    %cst = arith.constant dense<0.000000e+00> : vector<256x128xf32>
    %6 = tpu.matmul %3, %5, %cst {dimension_numbers = #tpu.dot_dimension_numbers<[1], [0], [0], [1], [0, 0, 1, 1], [], []>} : vector<256x512xbf16>, vector<512x128xbf16>, vector<256x128xf32> -> vector<256x128xf32>
    %7 = arith.addf %4, %6 : vector<256x128xf32>
    %c0_6 = arith.constant 0 : index
    %c0_7 = arith.constant 0 : index
    %8 = vector.load %arg6[%c0_6, %c0_7] : memref<256x128xf32, #tpu.memory_space<vmem>>, vector<256x128xf32>
    tpu.vector_store %arg6[%c0_6, %c0_7], %7 {strides = array<i32>} : memref<256x128xf32, #tpu.memory_space<vmem>>, vector<256x128xf32>,
    %c0_i32_8 = arith.constant 0 : i32
    %9 = arith.cmpi eq, %arg1, %c0_i32_8 : i32
    %10 = arith.extui %9 : i1 to i32
    %c0_i32_9 = arith.constant 0 : i32
    %11 = arith.cmpi ne, %10, %c0_i32_9 : i32
    scf.if %11 {
      %c0_10 = arith.constant 0 : index
      %c0_11 = arith.constant 0 : index
      %12 = vector.load %arg6[%c0_10, %c0_11] : memref<256x128xf32, #tpu.memory_space<vmem>>, vector<256x128xf32>
      %c0_12 = arith.constant 0 : index
      %c0_13 = arith.constant 0 : index
      %13 = vector.load %arg5[%c0_12, %c0_13] : memref<256x128xf32, #tpu.memory_space<vmem>>, vector<256x128xf32>
      tpu.vector_store %arg5[%c0_12, %c0_13], %12 {strides = array<i32>} : memref<256x128xf32, #tpu.memory_space<vmem>>, vector<256x128xf32>,
    } else {
    }
    return
  }
  func.func @transform_0(%arg0: i32, %arg1: i32) -> (i32, i32) {
    %c0_i32 = arith.constant 0 : i32
    return %arg0, %arg1 : i32, i32
  }
  func.func @transform_1(%arg0: i32, %arg1: i32) -> (i32, i32) {
    %c0_i32 = arith.constant 0 : i32
    %c0_i32_0 = arith.constant 0 : i32
    return %arg1, %c0_i32 : i32, i32
  }
  func.func @transform_2(%arg0: i32, %arg1: i32) -> (i32, i32) {
    %c0_i32 = arith.constant 0 : i32
    %c0_i32_0 = arith.constant 0 : i32
    return %arg0, %c0_i32 : i32, i32
  }
  func.func @transform_3(%arg0: i32, %arg1: i32) -> (i32, i32) {
    %c0_i32 = arith.constant 0 : i32
    %c0_i32_0 = arith.constant 0 : i32
    return %arg0, %c0_i32 : i32, i32
  }
}

</mosaic_0001>

<llo_original>
// kernel: tpu_custom_call.1
$region0: #{tpu_custom_call.1}
  #allocation0 [shape = 'u32[]', space=smem, size = 0x4, offset = 0x4, fixed_abs, tag = 'smem constant byte address 0x4 - core index']
  #allocation1 [shape = 'u32[72,128]{1,0:T(1,128)}', space=vmem, size = 0x9000, scoped, tag = 'internal scratch']
  #allocation2 [shape = 'f32[256,128]{1,0:T(8,128)}', space=vmem, size = 0x20000, scoped, tag = 'scratch operand']
  %s0 = inlined_call_operand.hbm [shape: bf16[512,512], index: 0, kind: input, shape index: {}]
  %s1 = inlined_call_operand.hbm [shape: bf16[512,128], index: 1, kind: input, shape index: {}]
  %s2 = inlined_call_operand.hbm [shape: f32[512,128], index: 2, kind: input, shape index: {}]
  %s3 = inlined_call_operand.hbm [shape: f32[512,128], index: 3, kind: output, shape index: {}]
  %s4 = sld [smem:[#allocation0]]
  $region65: #{tpu_custom_call.1} parent=0
    _
  %s6 = ssub.s32 1, %s4
  %s7 = scalar_select 0, %s6, %s4
  $region1: #{tpu_custom_call.1} parent=0
    #allocation3 [shape = 'u8[524288]{0}', space=vmem, size = 0x80000, scoped, tag = 'input window, operand 0']
    #allocation4 [shape = 's32[2]{0}', space=sflag, size = 0x8, scoped, tag = 'scoped memory for tpu_custom_call.1']
    #allocation5 [shape = 's32[2]{0}', space=sflag, size = 0x8, scoped, tag = 'scoped memory for tpu_custom_call.1']
    #allocation6 [shape = 'u8[131072]{0}', space=vmem, size = 0x20000, scoped, tag = 'input window, operand 1, single buffered']
    #allocation7 [shape = 's32[1]{0}', space=sflag, size = 0x4, scoped, tag = 'scoped memory for tpu_custom_call.1']
    #allocation8 [shape = 'u8[262144]{0}', space=vmem, size = 0x40000, scoped, tag = 'input window, operand 2']
    #allocation9 [shape = 'u8[262144]{0}', space=vmem, size = 0x40000, scoped, tag = 'output window, operand 0']
    %8 = vsyncpa [#allocation4], 0
    %s9 = scalar_lea.sflag [#allocation4], 1
    %10 = vsyncpa %s9, 0
    %11 = vsyncpa [#allocation7], 0
    %12 = vsyncpa [#allocation5], 0
    %s13 = scalar_lea.sflag [#allocation5], 1
    %14 = vsyncpa %s13, 0
    loop: start=0, step=1, limit=4
    $region2: #{tpu_custom_call.1} parent=1 // loop_pre_header
      _
    $region3: #{tpu_custom_call.1} parent=1 // loop_header
      %s16 = sphi 0, %s20
      %p17 = scmp.ge.s32.totalorder %s16, 4
      %s23 = sphi 0, %s35
      %s24 = sphi 0, %s31
      %s25 = sphi 0, %s23
      %s26 = sphi 0, %s24
      %s27 = sphi 0, %s25
      %s28 = sphi 0, %s26
      %s40 = sphi 0, %s42
      %s43 = sphi 0, %s40
      %s44 = sphi 0, %s43
      %s60 = sphi 0, %s44
      %s66 = sphi 0, %s68
      %s69 = sphi 0, %s66
      %s70 = sphi 0, %s69
      %s86 = sphi 0, %s70
      %s92 = sphi 0, %s94
      %s95 = sphi 0, %s92
      %s96 = sphi 0, %s95
      %s112 = sphi 0, %s96
      %s118 = sphi 0, %s120
      %s121 = sphi 0, %s118
      %s122 = sphi 0, %s121
      %s138 = sphi 0, %s122
    $region4: #{tpu_custom_call.1} parent=1 // loop_header_branch
      %19 = sbr.rel (%p17) target = $region8
    $region5: #{tpu_custom_call.1} parent=1 // loop_body
      %s21 = ssub.s32 %s16, 1
      %s22 = ssub.s32 %s16, 2
      %s29 = sadd.s32 1, %s24
      %p30 = scmp.ge.s32.totalorder %s29, 1
      %s31 = scalar_select %p30, 0, %s29
      %s32 = sadd.s32 1, %s23
      %s33 = scalar_select %p30, %s32, %s23
      %p34 = scmp.ge.s32.totalorder %s33, 2
      %s35 = scalar_select %p34, 0, %s33
      %s36 = ssub.s32 %s23, %s35
      %s37 = ssub.s32 %s24, %s31
      %s38 = sor.u32 %s36, %s37
      %p39 = scmp.eq.s32.totalorder %s38, 0
      %s41 = sadd.s32 %s40, 1
      %s42 = scalar_select %p39, %s40, %s41
      %p45 = pneg %p39
      %p46 = scmp.eq.s32.totalorder %s16, 1
      %p47 = por %p45, %p46
      %p48 = scmp.ne.s32.totalorder %s40, %s43
      %p49 = scmp.eq.s32.totalorder %s16, 0
      %p50 = por %p48, %p49
      %p51 = scmp.ne.s32.totalorder %s40, %s43
      %p52 = scmp.eq.s32.totalorder %s21, 1
      %p53 = por %p51, %p52
      %p54 = scmp.ne.s32.totalorder %s43, %s44
      %p55 = scmp.eq.s32.totalorder %s21, 0
      %p56 = por %p54, %p55
      %p57 = scmp.ne.s32.totalorder %s43, %s44
      %p58 = scmp.eq.s32.totalorder %s22, 1
      %p59 = por %p57, %p58
      %p61 = scmp.ne.s32.totalorder %s44, %s60
      %p62 = scmp.eq.s32.totalorder %s22, 0
      %p63 = por %p61, %p62
      %s64 = ssub.s32 %s24, %s31
      %p65 = scmp.eq.s32.totalorder %s64, 0
      %s67 = sadd.s32 %s66, 1
      %s68 = scalar_select %p65, %s66, %s67
      %p71 = pneg %p65
      %p72 = scmp.eq.s32.totalorder %s16, 1
      %p73 = por %p71, %p72
      %p74 = scmp.ne.s32.totalorder %s66, %s69
      %p75 = scmp.eq.s32.totalorder %s16, 0
      %p76 = por %p74, %p75
      %p77 = scmp.ne.s32.totalorder %s66, %s69
      %p78 = scmp.eq.s32.totalorder %s21, 1
      %p79 = por %p77, %p78
      %p80 = scmp.ne.s32.totalorder %s69, %s70
      %p81 = scmp.eq.s32.totalorder %s21, 0
      %p82 = por %p80, %p81
      %p83 = scmp.ne.s32.totalorder %s69, %s70
      %p84 = scmp.eq.s32.totalorder %s22, 1
      %p85 = por %p83, %p84
      %p87 = scmp.ne.s32.totalorder %s70, %s86
      %p88 = scmp.eq.s32.totalorder %s22, 0
      %p89 = por %p87, %p88
      %s90 = ssub.s32 %s23, %s35
      %p91 = scmp.eq.s32.totalorder %s90, 0
      %s93 = sadd.s32 %s92, 1
      %s94 = scalar_select %p91, %s92, %s93
      %p97 = pneg %p91
      %p98 = scmp.eq.s32.totalorder %s16, 1
      %p99 = por %p97, %p98
      %p100 = scmp.ne.s32.totalorder %s92, %s95
      %p101 = scmp.eq.s32.totalorder %s16, 0
      %p102 = por %p100, %p101
      %p103 = scmp.ne.s32.totalorder %s92, %s95
      %p104 = scmp.eq.s32.totalorder %s21, 1
      %p105 = por %p103, %p104
      %p106 = scmp.ne.s32.totalorder %s95, %s96
      %p107 = scmp.eq.s32.totalorder %s21, 0
      %p108 = por %p106, %p107
      %p109 = scmp.ne.s32.totalorder %s95, %s96
      %p110 = scmp.eq.s32.totalorder %s22, 1
      %p111 = por %p109, %p110
      %p113 = scmp.ne.s32.totalorder %s96, %s112
      %p114 = scmp.eq.s32.totalorder %s22, 0
      %p115 = por %p113, %p114
      %s116 = ssub.s32 %s23, %s35
      %p117 = scmp.eq.s32.totalorder %s116, 0
      %s119 = sadd.s32 %s118, 1
      %s120 = scalar_select %p117, %s118, %s119
      %p123 = pneg %p117
      %p124 = scmp.eq.s32.totalorder %s16, 1
      %p125 = por %p123, %p124
      %p126 = scmp.ne.s32.totalorder %s118, %s121
      %p127 = scmp.eq.s32.totalorder %s16, 0
      %p128 = por %p126, %p127
      %p129 = scmp.ne.s32.totalorder %s118, %s121
      %p130 = scmp.eq.s32.totalorder %s21, 1
      %p131 = por %p129, %p130
      %p132 = scmp.ne.s32.totalorder %s121, %s122
      %p133 = scmp.eq.s32.totalorder %s21, 0
      %p134 = por %p132, %p133
      %p135 = scmp.ne.s32.totalorder %s121, %s122
      %p136 = scmp.eq.s32.totalorder %s22, 1
      %p137 = por %p135, %p136
      %p139 = scmp.ne.s32.totalorder %s122, %s138
      %p140 = scmp.eq.s32.totalorder %s22, 0
      %p141 = por %p139, %p140
      %p142 = scmp.le.s32.totalorder 1, %s16
      %p143 = scmp.lt.s32.totalorder %s16, 3
      %p144 = pnand %p142, %p143
      %p145 = pneg %p144
      // Predicated region
      $region9: #{tpu_custom_call.1} parent=5 // pred_check
        _
      $region10: #{tpu_custom_call.1} parent=5 // pred_check_branch
        %147 = sbr.rel (%p144) target = $region12
      $region11: #{tpu_custom_call.1} parent=5 // pred_region
        %s148 = ssub.s32 %s16, 1
        // Predicated region
        $region13: #{tpu_custom_call.1} parent=11 // pred_check
          %p149 = pneg %p82
        $region14: #{tpu_custom_call.1} parent=11 // pred_check_branch
          %151 = sbr.rel (%p149) target = $region16
        $region15: #{tpu_custom_call.1} parent=11 // pred_region
          %s152 = smul.u32 64, %s26
          %154 = vsyncadd [#allocation7], 0
          %s155 = smul.addr %s152, 4
          %s156 = scalar_lea.hbm %s1, %s155
          %s157 = sshll.u32 %s156, 4
          %s158 = int_to_ptr.hbm [resolvable:$true] %s157
          %s159 = sshll.u32 [#allocation6], 4
          %s160 = int_to_ptr.vmem [resolvable:$true] %s159
          %165 = dma.hbm_to_vmem [thread:$0]  %s158, 4096, %s160, [#allocation7], 64, 64, 4
        $region16: #{tpu_custom_call.1} parent=11 // pred_fallthru
          _
      $region12: #{tpu_custom_call.1} parent=5 // pred_fallthru
        _
      %p166 = scmp.lt.s32.totalorder %s16, 2
      // Predicated region
      $region17: #{tpu_custom_call.1} parent=5 // pred_check
        %p167 = pneg %p166
      $region18: #{tpu_custom_call.1} parent=5 // pred_check_branch
        %169 = sbr.rel (%p167) target = $region20
      $region19: #{tpu_custom_call.1} parent=5 // pred_region
        // Predicated region
        $region21: #{tpu_custom_call.1} parent=19 // pred_check
          %p170 = pneg %p50
        $region22: #{tpu_custom_call.1} parent=19 // pred_check_branch
          %172 = sbr.rel (%p170) target = $region24
        $region23: #{tpu_custom_call.1} parent=19 // pred_region
          %s173 = sand.u32 %s16, 1
          %s174 = scalar_lea.sflag [#allocation4], %s173
          %s175 = sand.u32 %s40, 1
          %s176 = smul.addr %s175, 512
          %s177 = scalar_lea.vmem [#allocation3], %s176
          %s178 = smul.u32 32, %s23
          %s179 = smul.u32 4, %s24
          %181 = vsyncadd %s174, 0
          %s182 = smul.addr %s178, 4
          %s183 = sadd.s32 %s179, %s182
          %s184 = smul.addr %s183, 4
          %s185 = scalar_lea.hbm %s0, %s184
          %s186 = sshll.u32 %s185, 4
          %s187 = int_to_ptr.hbm [resolvable:$true] %s186
          %s188 = sshll.u32 %s177, 4
          %s189 = int_to_ptr.vmem [resolvable:$true] %s188
          %194 = dma.hbm_to_vmem [thread:$0]  %s187, 8192, %s189, %s174, 256, 256, 16
        $region24: #{tpu_custom_call.1} parent=19 // pred_fallthru
          _
        // Predicated region
        $region25: #{tpu_custom_call.1} parent=19 // pred_check
          %p195 = pneg %p102
        $region26: #{tpu_custom_call.1} parent=19 // pred_check_branch
          %197 = sbr.rel (%p195) target = $region28
        $region27: #{tpu_custom_call.1} parent=19 // pred_region
          %s198 = sand.u32 %s16, 1
          %s199 = scalar_lea.sflag [#allocation4], %s198
          %s200 = sand.u32 %s92, 1
          %s201 = smul.addr %s200, 256
          %s202 = scalar_lea.vmem [#allocation8], %s201
          %s203 = smul.u32 32, %s23
          %205 = vsyncadd %s199, 0
          %s206 = smul.addr %s203, 8
          %s207 = scalar_lea.hbm %s2, %s206
          %s208 = sshll.u32 %s207, 4
          %s209 = int_to_ptr.hbm [resolvable:$true] %s208
          %s210 = sshll.u32 %s202, 4
          %s211 = int_to_ptr.vmem [resolvable:$true] %s210
          %216 = dma.hbm_to_vmem [thread:$0]  %s209, 4096, %s211, %s199, 128, 128, 8
        $region28: #{tpu_custom_call.1} parent=19 // pred_fallthru
          _
      $region20: #{tpu_custom_call.1} parent=5 // pred_fallthru
        _
      %p217 = scmp.le.s32.totalorder 1, %s16
      %p218 = scmp.lt.s32.totalorder %s16, 3
      %p219 = pnand %p217, %p218
      %p220 = pneg %p219
      // Predicated region
      $region29: #{tpu_custom_call.1} parent=5 // pred_check
        _
      $region30: #{tpu_custom_call.1} parent=5 // pred_check_branch
        %222 = sbr.rel (%p219) target = $region32
      $region31: #{tpu_custom_call.1} parent=5 // pred_region
        %s223 = ssub.s32 %s16, 1
        %s224 = sand.u32 %s21, 1
        %s225 = scalar_lea.sflag [#allocation4], %s224
        %s226 = sand.u32 %s43, 1
        %s227 = smul.addr %s226, 512
        %s228 = scalar_lea.vmem [#allocation3], %s227
        // Predicated region
        $region33: #{tpu_custom_call.1} parent=31 // pred_check
          %p229 = pneg %p56
        $region34: #{tpu_custom_call.1} parent=31 // pred_check_branch
          %231 = sbr.rel (%p229) target = $region36
        $region35: #{tpu_custom_call.1} parent=31 // pred_region
          %233 = dma.done %s225, 8192
        $region36: #{tpu_custom_call.1} parent=31 // pred_fallthru
          _
        // Predicated region
        $region37: #{tpu_custom_call.1} parent=31 // pred_check
          %p234 = pneg %p82
        $region38: #{tpu_custom_call.1} parent=31 // pred_check_branch
          %236 = sbr.rel (%p234) target = $region40
        $region39: #{tpu_custom_call.1} parent=31 // pred_region
          %238 = dma.done [#allocation7], 4096
        $region40: #{tpu_custom_call.1} parent=31 // pred_fallthru
          _
        %s239 = sand.u32 %s21, 1
        %s240 = scalar_lea.sflag [#allocation4], %s239
        %s241 = sand.u32 %s95, 1
        %s242 = smul.addr %s241, 256
        %s243 = scalar_lea.vmem [#allocation8], %s242
        // Predicated region
        $region41: #{tpu_custom_call.1} parent=31 // pred_check
          %p244 = pneg %p108
        $region42: #{tpu_custom_call.1} parent=31 // pred_check_branch
          %246 = sbr.rel (%p244) target = $region44
        $region43: #{tpu_custom_call.1} parent=31 // pred_region
          %248 = dma.done %s240, 4096
        $region44: #{tpu_custom_call.1} parent=31 // pred_fallthru
          _
        %s249 = sand.u32 %s21, 1
        %s250 = scalar_lea.sflag [#allocation4], %s249
        %s251 = sand.u32 %s43, 1
        %s252 = smul.addr %s251, 512
        %s253 = scalar_lea.vmem [#allocation3], %s252
        %p254 = pneg %p56
        %p255 = pneg %p53
        %p256 = pneg %p82
        %p257 = pneg %p79
        %s258 = sand.u32 %s21, 1
        %s259 = scalar_lea.sflag [#allocation4], %s258
        %s260 = sand.u32 %s95, 1
        %s261 = smul.addr %s260, 256
        %s262 = scalar_lea.vmem [#allocation8], %s261
        %p263 = pneg %p108
        %p264 = pneg %p105
        %p265 = pneg %p134
        %p266 = pneg %p131
        %s267 = sand.u32 %s121, 1
        %s268 = scalar_lea.sflag [#allocation5], %s267
        %s269 = sand.u32 %s121, 1
        %s270 = smul.addr %s269, 256
        %s271 = scalar_lea.vmem [#allocation9], %s270
        %s272 = smul.u32 32, %s25
        %s273 = smul.u32 4, %s26
        %s274 = smul.u32 64, %s26
        %s275 = smul.u32 32, %s25
        %s276 = smul.u32 32, %s25
        %p277 = scmp.eq.s32.totalorder %s26, 0
        // Predicated region
        $region45: #{tpu_custom_call.1} parent=31 // pred_check
          %p278 = pneg %p277
        $region46: #{tpu_custom_call.1} parent=31 // pred_check_branch
          %280 = sbr.rel (%p278) target = $region48
        $region47: #{tpu_custom_call.1} parent=31 // pred_region
          %v281 = vld [vmem:[%s243] sm:$0xff]
          %v282 = vld [vmem:[%s243 + $0x8] sm:$0xff]
          %v283 = vld [vmem:[%s243 + $0x10] sm:$0xff]
          %v284 = vld [vmem:[%s243 + $0x18] sm:$0xff]
          %v285 = vld [vmem:[%s243 + $0x20] sm:$0xff]
          %v286 = vld [vmem:[%s243 + $0x28] sm:$0xff]
          %v287 = vld [vmem:[%s243 + $0x30] sm:$0xff]
          %v288 = vld [vmem:[%s243 + $0x38] sm:$0xff]
          %v289 = vld [vmem:[%s243 + $0x40] sm:$0xff]
          %v290 = vld [vmem:[%s243 + $0x48] sm:$0xff]
          %v291 = vld [vmem:[%s243 + $0x50] sm:$0xff]
          %v292 = vld [vmem:[%s243 + $0x58] sm:$0xff]
          %v293 = vld [vmem:[%s243 + $0x60] sm:$0xff]
          %v294 = vld [vmem:[%s243 + $0x68] sm:$0xff]
          %v295 = vld [vmem:[%s243 + $0x70] sm:$0xff]
          %v296 = vld [vmem:[%s243 + $0x78] sm:$0xff]
          %v297 = vld [vmem:[%s243 + $0x80] sm:$0xff]
          %v298 = vld [vmem:[%s243 + $0x88] sm:$0xff]
          %v299 = vld [vmem:[%s243 + $0x90] sm:$0xff]
          %v300 = vld [vmem:[%s243 + $0x98] sm:$0xff]
          %v301 = vld [vmem:[%s243 + $0xa0] sm:$0xff]
          %v302 = vld [vmem:[%s243 + $0xa8] sm:$0xff]
          %v303 = vld [vmem:[%s243 + $0xb0] sm:$0xff]
          %v304 = vld [vmem:[%s243 + $0xb8] sm:$0xff]
          %v305 = vld [vmem:[%s243 + $0xc0] sm:$0xff]
          %v306 = vld [vmem:[%s243 + $0xc8] sm:$0xff]
          %v307 = vld [vmem:[%s243 + $0xd0] sm:$0xff]
          %v308 = vld [vmem:[%s243 + $0xd8] sm:$0xff]
          %v309 = vld [vmem:[%s243 + $0xe0] sm:$0xff]
          %v310 = vld [vmem:[%s243 + $0xe8] sm:$0xff]
          %v311 = vld [vmem:[%s243 + $0xf0] sm:$0xff]
          %v312 = vld [vmem:[%s243 + $0xf8] sm:$0xff]
          %313 = vst [vmem:[#allocation2] sm:$0xff] %v281
          %314 = vst [vmem:[#allocation2 + $0x8] sm:$0xff] %v282
          %315 = vst [vmem:[#allocation2 + $0x10] sm:$0xff] %v283
          %316 = vst [vmem:[#allocation2 + $0x18] sm:$0xff] %v284
          %317 = vst [vmem:[#allocation2 + $0x20] sm:$0xff] %v285
          %318 = vst [vmem:[#allocation2 + $0x28] sm:$0xff] %v286
          %319 = vst [vmem:[#allocation2 + $0x30] sm:$0xff] %v287
          %320 = vst [vmem:[#allocation2 + $0x38] sm:$0xff] %v288
          %321 = vst [vmem:[#allocation2 + $0x40] sm:$0xff] %v289
          %322 = vst [vmem:[#allocation2 + $0x48] sm:$0xff] %v290
          %323 = vst [vmem:[#allocation2 + $0x50] sm:$0xff] %v291
          %324 = vst [vmem:[#allocation2 + $0x58] sm:$0xff] %v292
          %325 = vst [vmem:[#allocation2 + $0x60] sm:$0xff] %v293
          %326 = vst [vmem:[#allocation2 + $0x68] sm:$0xff] %v294
          %327 = vst [vmem:[#allocation2 + $0x70] sm:$0xff] %v295
          %328 = vst [vmem:[#allocation2 + $0x78] sm:$0xff] %v296
          %329 = vst [vmem:[#allocation2 + $0x80] sm:$0xff] %v297
          %330 = vst [vmem:[#allocation2 + $0x88] sm:$0xff] %v298
          %331 = vst [vmem:[#allocation2 + $0x90] sm:$0xff] %v299
          %332 = vst [vmem:[#allocation2 + $0x98] sm:$0xff] %v300
          %333 = vst [vmem:[#allocation2 + $0xa0] sm:$0xff] %v301
          %334 = vst [vmem:[#allocation2 + $0xa8] sm:$0xff] %v302
          %335 = vst [vmem:[#allocation2 + $0xb0] sm:$0xff] %v303
          %336 = vst [vmem:[#allocation2 + $0xb8] sm:$0xff] %v304
          %337 = vst [vmem:[#allocation2 + $0xc0] sm:$0xff] %v305
          %338 = vst [vmem:[#allocation2 + $0xc8] sm:$0xff] %v306
          %339 = vst [vmem:[#allocation2 + $0xd0] sm:$0xff] %v307
          %340 = vst [vmem:[#allocation2 + $0xd8] sm:$0xff] %v308
          %341 = vst [vmem:[#allocation2 + $0xe0] sm:$0xff] %v309
          %342 = vst [vmem:[#allocation2 + $0xe8] sm:$0xff] %v310
          %343 = vst [vmem:[#allocation2 + $0xf0] sm:$0xff] %v311
          %344 = vst [vmem:[#allocation2 + $0xf8] sm:$0xff] %v312
        $region48: #{tpu_custom_call.1} parent=31 // pred_fallthru
          _
        %v345 = vld [vmem:[%s228] sm:$0xff]
        %v346 = vld [vmem:[%s228 + $0x8] sm:$0xff]
        %v347 = vld [vmem:[%s228 + $0x10] sm:$0xff]
        %v348 = vld [vmem:[%s228 + $0x18] sm:$0xff]
        %v349 = vld [vmem:[%s228 + $0x20] sm:$0xff]
        %v350 = vld [vmem:[%s228 + $0x28] sm:$0xff]
        %v351 = vld [vmem:[%s228 + $0x30] sm:$0xff]
        %v352 = vld [vmem:[%s228 + $0x38] sm:$0xff]
        %v353 = vld [vmem:[%s228 + $0x40] sm:$0xff]
        %v354 = vld [vmem:[%s228 + $0x48] sm:$0xff]
        %v355 = vld [vmem:[%s228 + $0x50] sm:$0xff]
        %v356 = vld [vmem:[%s228 + $0x58] sm:$0xff]
        %v357 = vld [vmem:[%s228 + $0x60] sm:$0xff]
        %v358 = vld [vmem:[%s228 + $0x68] sm:$0xff]
        %v359 = vld [vmem:[%s228 + $0x70] sm:$0xff]
        %v360 = vld [vmem:[%s228 + $0x78] sm:$0xff]
        %v361 = vld [vmem:[%s228 + $0x80] sm:$0xff]
        %v362 = vld [vmem:[%s228 + $0x88] sm:$0xff]
        %v363 = vld [vmem:[%s228 + $0x90] sm:$0xff]
        %v364 = vld [vmem:[%s228 + $0x98] sm:$0xff]
        %v365 = vld [vmem:[%s228 + $0xa0] sm:$0xff]
        %v366 = vld [vmem:[%s228 + $0xa8] sm:$0xff]
        %v367 = vld [vmem:[%s228 + $0xb0] sm:$0xff]
        %v368 = vld [vmem:[%s228 + $0xb8] sm:$0xff]
        %v369 = vld [vmem:[%s228 + $0xc0] sm:$0xff]
        %v370 = vld [vmem:[%s228 + $0xc8] sm:$0xff]
        %v371 = vld [vmem:[%s228 + $0xd0] sm:$0xff]
        %v372 = vld [vmem:[%s228 + $0xd8] sm:$0xff]
        %v373 = vld [vmem:[%s228 + $0xe0] sm:$0xff]
        %v374 = vld [vmem:[%s228 + $0xe8] sm:$0xff]
        %v375 = vld [vmem:[%s228 + $0xf0] sm:$0xff]
        %v376 = vld [vmem:[%s228 + $0xf8] sm:$0xff]
        %v377 = vld [vmem:[%s228 + $0x100] sm:$0xff]
        %v378 = vld [vmem:[%s228 + $0x108] sm:$0xff]
        %v379 = vld [vmem:[%s228 + $0x110] sm:$0xff]
        %v380 = vld [vmem:[%s228 + $0x118] sm:$0xff]
        %v381 = vld [vmem:[%s228 + $0x120] sm:$0xff]
        %v382 = vld [vmem:[%s228 + $0x128] sm:$0xff]
        %v383 = vld [vmem:[%s228 + $0x130] sm:$0xff]
        %v384 = vld [vmem:[%s228 + $0x138] sm:$0xff]
        %v385 = vld [vmem:[%s228 + $0x140] sm:$0xff]
        %v386 = vld [vmem:[%s228 + $0x148] sm:$0xff]
        %v387 = vld [vmem:[%s228 + $0x150] sm:$0xff]
        %v388 = vld [vmem:[%s228 + $0x158] sm:$0xff]
        %v389 = vld [vmem:[%s228 + $0x160] sm:$0xff]
        %v390 = vld [vmem:[%s228 + $0x168] sm:$0xff]
        %v391 = vld [vmem:[%s228 + $0x170] sm:$0xff]
        %v392 = vld [vmem:[%s228 + $0x178] sm:$0xff]
        %v393 = vld [vmem:[%s228 + $0x180] sm:$0xff]
        %v394 = vld [vmem:[%s228 + $0x188] sm:$0xff]
        %v395 = vld [vmem:[%s228 + $0x190] sm:$0xff]
        %v396 = vld [vmem:[%s228 + $0x198] sm:$0xff]
        %v397 = vld [vmem:[%s228 + $0x1a0] sm:$0xff]
        %v398 = vld [vmem:[%s228 + $0x1a8] sm:$0xff]
        %v399 = vld [vmem:[%s228 + $0x1b0] sm:$0xff]
        %v400 = vld [vmem:[%s228 + $0x1b8] sm:$0xff]
        %v401 = vld [vmem:[%s228 + $0x1c0] sm:$0xff]
        %v402 = vld [vmem:[%s228 + $0x1c8] sm:$0xff]
        %v403 = vld [vmem:[%s228 + $0x1d0] sm:$0xff]
        %v404 = vld [vmem:[%s228 + $0x1d8] sm:$0xff]
        %v405 = vld [vmem:[%s228 + $0x1e0] sm:$0xff]
        %v406 = vld [vmem:[%s228 + $0x1e8] sm:$0xff]
        %v407 = vld [vmem:[%s228 + $0x1f0] sm:$0xff]
        %v408 = vld [vmem:[%s228 + $0x1f8] sm:$0xff]
        %v409 = vld [vmem:[#allocation2] sm:$0xff]
        %v410 = vld [vmem:[#allocation2 + $0x8] sm:$0xff]
        %v411 = vld [vmem:[#allocation2 + $0x10] sm:$0xff]
        %v412 = vld [vmem:[#allocation2 + $0x18] sm:$0xff]
        %v413 = vld [vmem:[#allocation2 + $0x20] sm:$0xff]
        %v414 = vld [vmem:[#allocation2 + $0x28] sm:$0xff]
        %v415 = vld [vmem:[#allocation2 + $0x30] sm:$0xff]
        %v416 = vld [vmem:[#allocation2 + $0x38] sm:$0xff]
        %v417 = vld [vmem:[#allocation2 + $0x40] sm:$0xff]
        %v418 = vld [vmem:[#allocation2 + $0x48] sm:$0xff]
        %v419 = vld [vmem:[#allocation2 + $0x50] sm:$0xff]
        %v420 = vld [vmem:[#allocation2 + $0x58] sm:$0xff]
        %v421 = vld [vmem:[#allocation2 + $0x60] sm:$0xff]
        %v422 = vld [vmem:[#allocation2 + $0x68] sm:$0xff]
        %v423 = vld [vmem:[#allocation2 + $0x70] sm:$0xff]
        %v424 = vld [vmem:[#allocation2 + $0x78] sm:$0xff]
        %v425 = vld [vmem:[#allocation2 + $0x80] sm:$0xff]
        %v426 = vld [vmem:[#allocation2 + $0x88] sm:$0xff]
        %v427 = vld [vmem:[#allocation2 + $0x90] sm:$0xff]
        %v428 = vld [vmem:[#allocation2 + $0x98] sm:$0xff]
        %v429 = vld [vmem:[#allocation2 + $0xa0] sm:$0xff]
        %v430 = vld [vmem:[#allocation2 + $0xa8] sm:$0xff]
        %v431 = vld [vmem:[#allocation2 + $0xb0] sm:$0xff]
        %v432 = vld [vmem:[#allocation2 + $0xb8] sm:$0xff]
        %v433 = vld [vmem:[#allocation2 + $0xc0] sm:$0xff]
        %v434 = vld [vmem:[#allocation2 + $0xc8] sm:$0xff]
        %v435 = vld [vmem:[#allocation2 + $0xd0] sm:$0xff]
        %v436 = vld [vmem:[#allocation2 + $0xd8] sm:$0xff]
        %v437 = vld [vmem:[#allocation2 + $0xe0] sm:$0xff]
        %v438 = vld [vmem:[#allocation2 + $0xe8] sm:$0xff]
        %v439 = vld [vmem:[#allocation2 + $0xf0] sm:$0xff]
        %v440 = vld [vmem:[#allocation2 + $0xf8] sm:$0xff]
        %v441 = vld [vmem:[#allocation6] sm:$0xf]
        %v442 = vld [vmem:[#allocation6 + $0x4] sm:$0xf]
        %v443 = vld [vmem:[#allocation6 + $0x8] sm:$0xf]
        %v444 = vld [vmem:[#allocation6 + $0xc] sm:$0xf]
        %v445 = vld [vmem:[#allocation6 + $0x10] sm:$0xf]
        %v446 = vld [vmem:[#allocation6 + $0x14] sm:$0xf]
        %v447 = vld [vmem:[#allocation6 + $0x18] sm:$0xf]
        %v448 = vld [vmem:[#allocation6 + $0x1c] sm:$0xf]
        %v449 = vld [vmem:[#allocation6 + $0x20] sm:$0xf]
        %v450 = vld [vmem:[#allocation6 + $0x24] sm:$0xf]
        %v451 = vld [vmem:[#allocation6 + $0x28] sm:$0xf]
        %v452 = vld [vmem:[#allocation6 + $0x2c] sm:$0xf]
        %v453 = vld [vmem:[#allocation6 + $0x30] sm:$0xf]
        %v454 = vld [vmem:[#allocation6 + $0x34] sm:$0xf]
        %v455 = vld [vmem:[#allocation6 + $0x38] sm:$0xf]
        %v456 = vld [vmem:[#allocation6 + $0x3c] sm:$0xf]
        %v457 = vld [vmem:[#allocation6 + $0x40] sm:$0xf]
        %v458 = vld [vmem:[#allocation6 + $0x44] sm:$0xf]
        %v459 = vld [vmem:[#allocation6 + $0x48] sm:$0xf]
        %v460 = vld [vmem:[#allocation6 + $0x4c] sm:$0xf]
        %v461 = vld [vmem:[#allocation6 + $0x50] sm:$0xf]
        %v462 = vld [vmem:[#allocation6 + $0x54] sm:$0xf]
        %v463 = vld [vmem:[#allocation6 + $0x58] sm:$0xf]
        %v464 = vld [vmem:[#allocation6 + $0x5c] sm:$0xf]
        %v465 = vld [vmem:[#allocation6 + $0x60] sm:$0xf]
        %v466 = vld [vmem:[#allocation6 + $0x64] sm:$0xf]
        %v467 = vld [vmem:[#allocation6 + $0x68] sm:$0xf]
        %v468 = vld [vmem:[#allocation6 + $0x6c] sm:$0xf]
        %v469 = vld [vmem:[#allocation6 + $0x70] sm:$0xf]
        %v470 = vld [vmem:[#allocation6 + $0x74] sm:$0xf]
        %v471 = vld [vmem:[#allocation6 + $0x78] sm:$0xf]
        %v472 = vld [vmem:[#allocation6 + $0x7c] sm:$0xf]
        %v473 = vld [vmem:[#allocation6 + $0x80] sm:$0xf]
        %v474 = vld [vmem:[#allocation6 + $0x84] sm:$0xf]
        %v475 = vld [vmem:[#allocation6 + $0x88] sm:$0xf]
        %v476 = vld [vmem:[#allocation6 + $0x8c] sm:$0xf]
        %v477 = vld [vmem:[#allocation6 + $0x90] sm:$0xf]
        %v478 = vld [vmem:[#allocation6 + $0x94] sm:$0xf]
        %v479 = vld [vmem:[#allocation6 + $0x98] sm:$0xf]
        %v480 = vld [vmem:[#allocation6 + $0x9c] sm:$0xf]
        %v481 = vld [vmem:[#allocation6 + $0xa0] sm:$0xf]
        %v482 = vld [vmem:[#allocation6 + $0xa4] sm:$0xf]
        %v483 = vld [vmem:[#allocation6 + $0xa8] sm:$0xf]
        %v484 = vld [vmem:[#allocation6 + $0xac] sm:$0xf]
        %v485 = vld [vmem:[#allocation6 + $0xb0] sm:$0xf]
        %v486 = vld [vmem:[#allocation6 + $0xb4] sm:$0xf]
        %v487 = vld [vmem:[#allocation6 + $0xb8] sm:$0xf]
        %v488 = vld [vmem:[#allocation6 + $0xbc] sm:$0xf]
        %v489 = vld [vmem:[#allocation6 + $0xc0] sm:$0xf]
        %v490 = vld [vmem:[#allocation6 + $0xc4] sm:$0xf]
        %v491 = vld [vmem:[#allocation6 + $0xc8] sm:$0xf]
        %v492 = vld [vmem:[#allocation6 + $0xcc] sm:$0xf]
        %v493 = vld [vmem:[#allocation6 + $0xd0] sm:$0xf]
        %v494 = vld [vmem:[#allocation6 + $0xd4] sm:$0xf]
        %v495 = vld [vmem:[#allocation6 + $0xd8] sm:$0xf]
        %v496 = vld [vmem:[#allocation6 + $0xdc] sm:$0xf]
        %v497 = vld [vmem:[#allocation6 + $0xe0] sm:$0xf]
        %v498 = vld [vmem:[#allocation6 + $0xe4] sm:$0xf]
        %v499 = vld [vmem:[#allocation6 + $0xe8] sm:$0xf]
        %v500 = vld [vmem:[#allocation6 + $0xec] sm:$0xf]
        %v501 = vld [vmem:[#allocation6 + $0xf0] sm:$0xf]
        %v502 = vld [vmem:[#allocation6 + $0xf4] sm:$0xf]
        %v503 = vld [vmem:[#allocation6 + $0xf8] sm:$0xf]
        %v504 = vld [vmem:[#allocation6 + $0xfc] sm:$0xf]
        %v569 = vunpack.c.l.b16 %v345
        %v570 = vunpack.c.h.b16 %v345
        %v571 = vunpack.c.l.b16 %v346
        %v572 = vunpack.c.h.b16 %v346
        %v573 = vunpack.c.l.b16 %v347
        %v574 = vunpack.c.h.b16 %v347
        %v575 = vunpack.c.l.b16 %v348
        %v576 = vunpack.c.h.b16 %v348
        %v577 = vunpack.c.l.b16 %v349
        %v578 = vunpack.c.h.b16 %v349
        %v579 = vunpack.c.l.b16 %v350
        %v580 = vunpack.c.h.b16 %v350
        %v581 = vunpack.c.l.b16 %v351
        %v582 = vunpack.c.h.b16 %v351
        %v583 = vunpack.c.l.b16 %v352
        %v584 = vunpack.c.h.b16 %v352
        %v585 = vunpack.c.l.b16 %v353
        %v586 = vunpack.c.h.b16 %v353
        %v587 = vunpack.c.l.b16 %v354
        %v588 = vunpack.c.h.b16 %v354
        %v589 = vunpack.c.l.b16 %v355
        %v590 = vunpack.c.h.b16 %v355
        %v591 = vunpack.c.l.b16 %v356
        %v592 = vunpack.c.h.b16 %v356
        %v593 = vunpack.c.l.b16 %v357
        %v594 = vunpack.c.h.b16 %v357
        %v595 = vunpack.c.l.b16 %v358
        %v596 = vunpack.c.h.b16 %v358
        %v597 = vunpack.c.l.b16 %v359
        %v598 = vunpack.c.h.b16 %v359
        %v599 = vunpack.c.l.b16 %v360
        %v600 = vunpack.c.h.b16 %v360
        %v601 = vunpack.c.l.b16 %v361
        %v602 = vunpack.c.h.b16 %v361
        %v603 = vunpack.c.l.b16 %v362
        %v604 = vunpack.c.h.b16 %v362
        %v605 = vunpack.c.l.b16 %v363
        %v606 = vunpack.c.h.b16 %v363
        %v607 = vunpack.c.l.b16 %v364
        %v608 = vunpack.c.h.b16 %v364
        %v609 = vunpack.c.l.b16 %v365
        %v610 = vunpack.c.h.b16 %v365
        %v611 = vunpack.c.l.b16 %v366
        %v612 = vunpack.c.h.b16 %v366
        %v613 = vunpack.c.l.b16 %v367
        %v614 = vunpack.c.h.b16 %v367
        %v615 = vunpack.c.l.b16 %v368
        %v616 = vunpack.c.h.b16 %v368
        %v617 = vunpack.c.l.b16 %v369
        %v618 = vunpack.c.h.b16 %v369
        %v619 = vunpack.c.l.b16 %v370
        %v620 = vunpack.c.h.b16 %v370
        %v621 = vunpack.c.l.b16 %v371
        %v622 = vunpack.c.h.b16 %v371
        %v623 = vunpack.c.l.b16 %v372
        %v624 = vunpack.c.h.b16 %v372
        %v625 = vunpack.c.l.b16 %v373
        %v626 = vunpack.c.h.b16 %v373
        %v627 = vunpack.c.l.b16 %v374
        %v628 = vunpack.c.h.b16 %v374
        %v629 = vunpack.c.l.b16 %v375
        %v630 = vunpack.c.h.b16 %v375
        %v631 = vunpack.c.l.b16 %v376
        %v632 = vunpack.c.h.b16 %v376
        %v633 = vunpack.c.l.b16 %v377
        %v634 = vunpack.c.h.b16 %v377
        %v635 = vunpack.c.l.b16 %v378
        %v636 = vunpack.c.h.b16 %v378
        %v637 = vunpack.c.l.b16 %v379
        %v638 = vunpack.c.h.b16 %v379
        %v639 = vunpack.c.l.b16 %v380
        %v640 = vunpack.c.h.b16 %v380
        %v641 = vunpack.c.l.b16 %v381
        %v642 = vunpack.c.h.b16 %v381
        %v643 = vunpack.c.l.b16 %v382
        %v644 = vunpack.c.h.b16 %v382
        %v645 = vunpack.c.l.b16 %v383
        %v646 = vunpack.c.h.b16 %v383
        %v647 = vunpack.c.l.b16 %v384
        %v648 = vunpack.c.h.b16 %v384
        %v649 = vunpack.c.l.b16 %v385
        %v650 = vunpack.c.h.b16 %v385
        %v651 = vunpack.c.l.b16 %v386
        %v652 = vunpack.c.h.b16 %v386
        %v653 = vunpack.c.l.b16 %v387
        %v654 = vunpack.c.h.b16 %v387
        %v655 = vunpack.c.l.b16 %v388
        %v656 = vunpack.c.h.b16 %v388
        %v657 = vunpack.c.l.b16 %v389
        %v658 = vunpack.c.h.b16 %v389
        %v659 = vunpack.c.l.b16 %v390
        %v660 = vunpack.c.h.b16 %v390
        %v661 = vunpack.c.l.b16 %v391
        %v662 = vunpack.c.h.b16 %v391
        %v663 = vunpack.c.l.b16 %v392
        %v664 = vunpack.c.h.b16 %v392
        %v665 = vunpack.c.l.b16 %v393
        %v666 = vunpack.c.h.b16 %v393
        %v667 = vunpack.c.l.b16 %v394
        %v668 = vunpack.c.h.b16 %v394
        %v669 = vunpack.c.l.b16 %v395
        %v670 = vunpack.c.h.b16 %v395
        %v671 = vunpack.c.l.b16 %v396
        %v672 = vunpack.c.h.b16 %v396
        %v673 = vunpack.c.l.b16 %v397
        %v674 = vunpack.c.h.b16 %v397
        %v675 = vunpack.c.l.b16 %v398
        %v676 = vunpack.c.h.b16 %v398
        %v677 = vunpack.c.l.b16 %v399
        %v678 = vunpack.c.h.b16 %v399
        %v679 = vunpack.c.l.b16 %v400
        %v680 = vunpack.c.h.b16 %v400
        %v681 = vunpack.c.l.b16 %v401
        %v682 = vunpack.c.h.b16 %v401
        %v683 = vunpack.c.l.b16 %v402
        %v684 = vunpack.c.h.b16 %v402
        %v685 = vunpack.c.l.b16 %v403
        %v686 = vunpack.c.h.b16 %v403
        %v687 = vunpack.c.l.b16 %v404
        %v688 = vunpack.c.h.b16 %v404
        %v689 = vunpack.c.l.b16 %v405
        %v690 = vunpack.c.h.b16 %v405
        %v691 = vunpack.c.l.b16 %v406
        %v692 = vunpack.c.h.b16 %v406
        %v693 = vunpack.c.l.b16 %v407
        %v694 = vunpack.c.h.b16 %v407
        %v695 = vunpack.c.l.b16 %v408
        %v696 = vunpack.c.h.b16 %v408
        %v697 = vpack.c.b16 %v573, %v569
        %v698 = vpack.c.b16 %v574, %v570
        %v699 = vpack.c.b16 %v575, %v571
        %v700 = vpack.c.b16 %v576, %v572
        %v701 = vpack.c.b16 %v581, %v577
        %v702 = vpack.c.b16 %v582, %v578
        %v703 = vpack.c.b16 %v583, %v579
        %v704 = vpack.c.b16 %v584, %v580
        %v705 = vpack.c.b16 %v589, %v585
        %v706 = vpack.c.b16 %v590, %v586
        %v707 = vpack.c.b16 %v591, %v587
        %v708 = vpack.c.b16 %v592, %v588
        %v709 = vpack.c.b16 %v597, %v593
        %v710 = vpack.c.b16 %v598, %v594
        %v711 = vpack.c.b16 %v599, %v595
        %v712 = vpack.c.b16 %v600, %v596
        %v713 = vpack.c.b16 %v605, %v601
        %v714 = vpack.c.b16 %v606, %v602
        %v715 = vpack.c.b16 %v607, %v603
        %v716 = vpack.c.b16 %v608, %v604
        %v717 = vpack.c.b16 %v613, %v609
        %v718 = vpack.c.b16 %v614, %v610
        %v719 = vpack.c.b16 %v615, %v611
        %v720 = vpack.c.b16 %v616, %v612
        %v721 = vpack.c.b16 %v621, %v617
        %v722 = vpack.c.b16 %v622, %v618
        %v723 = vpack.c.b16 %v623, %v619
        %v724 = vpack.c.b16 %v624, %v620
        %v725 = vpack.c.b16 %v629, %v625
        %v726 = vpack.c.b16 %v630, %v626
        %v727 = vpack.c.b16 %v631, %v627
        %v728 = vpack.c.b16 %v632, %v628
        %v729 = vpack.c.b16 %v637, %v633
        %v730 = vpack.c.b16 %v638, %v634
        %v731 = vpack.c.b16 %v639, %v635
        %v732 = vpack.c.b16 %v640, %v636
        %v733 = vpack.c.b16 %v645, %v641
        %v734 = vpack.c.b16 %v646, %v642
        %v735 = vpack.c.b16 %v647, %v643
        %v736 = vpack.c.b16 %v648, %v644
        %v737 = vpack.c.b16 %v653, %v649
        %v738 = vpack.c.b16 %v654, %v650
        %v739 = vpack.c.b16 %v655, %v651
        %v740 = vpack.c.b16 %v656, %v652
        %v741 = vpack.c.b16 %v661, %v657
        %v742 = vpack.c.b16 %v662, %v658
        %v743 = vpack.c.b16 %v663, %v659
        %v744 = vpack.c.b16 %v664, %v660
        %v745 = vpack.c.b16 %v669, %v665
        %v746 = vpack.c.b16 %v670, %v666
        %v747 = vpack.c.b16 %v671, %v667
        %v748 = vpack.c.b16 %v672, %v668
        %v749 = vpack.c.b16 %v677, %v673
        %v750 = vpack.c.b16 %v678, %v674
        %v751 = vpack.c.b16 %v679, %v675
        %v752 = vpack.c.b16 %v680, %v676
        %v753 = vpack.c.b16 %v685, %v681
        %v754 = vpack.c.b16 %v686, %v682
        %v755 = vpack.c.b16 %v687, %v683
        %v756 = vpack.c.b16 %v688, %v684
        %v757 = vpack.c.b16 %v693, %v689
        %v758 = vpack.c.b16 %v694, %v690
        %v759 = vpack.c.b16 %v695, %v691
        %v760 = vpack.c.b16 %v696, %v692
        %v889 = vunpack.c.l.b16 %v441
        %v890 = vunpack.c.l.b16 %v442
        %v891 = vunpack.c.l.b16 %v443
        %v892 = vunpack.c.l.b16 %v444
        %v893 = vunpack.c.l.b16 %v445
        %v894 = vunpack.c.l.b16 %v446
        %v895 = vunpack.c.l.b16 %v447
        %v896 = vunpack.c.l.b16 %v448
        %v897 = vunpack.c.l.b16 %v449
        %v898 = vunpack.c.l.b16 %v450
        %v899 = vunpack.c.l.b16 %v451
        %v900 = vunpack.c.l.b16 %v452
        %v901 = vunpack.c.l.b16 %v453
        %v902 = vunpack.c.l.b16 %v454
        %v903 = vunpack.c.l.b16 %v455
        %v904 = vunpack.c.l.b16 %v456
        %v905 = vunpack.c.l.b16 %v457
        %v906 = vunpack.c.l.b16 %v458
        %v907 = vunpack.c.l.b16 %v459
        %v908 = vunpack.c.l.b16 %v460
        %v909 = vunpack.c.l.b16 %v461
        %v910 = vunpack.c.l.b16 %v462
        %v911 = vunpack.c.l.b16 %v463
        %v912 = vunpack.c.l.b16 %v464
        %v913 = vunpack.c.l.b16 %v465
        %v914 = vunpack.c.l.b16 %v466
        %v915 = vunpack.c.l.b16 %v467
        %v916 = vunpack.c.l.b16 %v468
        %v917 = vunpack.c.l.b16 %v469
        %v918 = vunpack.c.l.b16 %v470
        %v919 = vunpack.c.l.b16 %v471
        %v920 = vunpack.c.l.b16 %v472
        %v921 = vunpack.c.l.b16 %v473
        %v922 = vunpack.c.l.b16 %v474
        %v923 = vunpack.c.l.b16 %v475
        %v924 = vunpack.c.l.b16 %v476
        %v925 = vunpack.c.l.b16 %v477
        %v926 = vunpack.c.l.b16 %v478
        %v927 = vunpack.c.l.b16 %v479
        %v928 = vunpack.c.l.b16 %v480
        %v929 = vunpack.c.l.b16 %v481
        %v930 = vunpack.c.l.b16 %v482
        %v931 = vunpack.c.l.b16 %v483
        %v932 = vunpack.c.l.b16 %v484
        %v933 = vunpack.c.l.b16 %v485
        %v934 = vunpack.c.l.b16 %v486
        %v935 = vunpack.c.l.b16 %v487
        %v936 = vunpack.c.l.b16 %v488
        %v937 = vunpack.c.l.b16 %v489
        %v938 = vunpack.c.l.b16 %v490
        %v939 = vunpack.c.l.b16 %v491
        %v940 = vunpack.c.l.b16 %v492
        %v941 = vunpack.c.l.b16 %v493
        %v942 = vunpack.c.l.b16 %v494
        %v943 = vunpack.c.l.b16 %v495
        %v944 = vunpack.c.l.b16 %v496
        %v945 = vunpack.c.l.b16 %v497
        %v946 = vunpack.c.l.b16 %v498
        %v947 = vunpack.c.l.b16 %v499
        %v948 = vunpack.c.l.b16 %v500
        %v949 = vunpack.c.l.b16 %v501
        %v950 = vunpack.c.l.b16 %v502
        %v951 = vunpack.c.l.b16 %v503
        %v952 = vunpack.c.l.b16 %v504
        %v953 = vpack.c.b16 %v890, %v889
        %v954 = vpack.c.b16 %v892, %v891
        %v955 = vpack.c.b16 %v894, %v893
        %v956 = vpack.c.b16 %v896, %v895
        %v957 = vpack.c.b16 %v898, %v897
        %v958 = vpack.c.b16 %v900, %v899
        %v959 = vpack.c.b16 %v902, %v901
        %v960 = vpack.c.b16 %v904, %v903
        %v961 = vpack.c.b16 %v906, %v905
        %v962 = vpack.c.b16 %v908, %v907
        %v963 = vpack.c.b16 %v910, %v909
        %v964 = vpack.c.b16 %v912, %v911
        %v965 = vpack.c.b16 %v914, %v913
        %v966 = vpack.c.b16 %v916, %v915
        %v967 = vpack.c.b16 %v918, %v917
        %v968 = vpack.c.b16 %v920, %v919
        %v969 = vpack.c.b16 %v922, %v921
        %v970 = vpack.c.b16 %v924, %v923
        %v971 = vpack.c.b16 %v926, %v925
        %v972 = vpack.c.b16 %v928, %v927
        %v973 = vpack.c.b16 %v930, %v929
        %v974 = vpack.c.b16 %v932, %v931
        %v975 = vpack.c.b16 %v934, %v933
        %v976 = vpack.c.b16 %v936, %v935
        %v977 = vpack.c.b16 %v938, %v937
        %v978 = vpack.c.b16 %v940, %v939
        %v979 = vpack.c.b16 %v942, %v941
        %v980 = vpack.c.b16 %v944, %v943
        %v981 = vpack.c.b16 %v946, %v945
        %v982 = vpack.c.b16 %v948, %v947
        %v983 = vpack.c.b16 %v950, %v949
        %v984 = vpack.c.b16 %v952, %v951
        %1017 = vmatpush.bf16.msra.mxu0 %v960
        %1018 = vmatpush.bf16.msra.mxu0 %v959
        %1019 = vmatpush.bf16.msra.mxu0 %v958
        %1020 = vmatpush.bf16.msra.mxu0 %v957
        %1021 = vmatpush.bf16.msra.mxu0 %v956
        %1022 = vmatpush.bf16.msra.mxu0 %v955
        %1023 = vmatpush.bf16.msra.mxu0 %v954
        %1024 = vmatpush.bf16.msra.mxu0 %v953
        %1025 = vmatmul.bf16.gmra.mxu0 %v697
        %v1026 = vpop.f32.mrf.mxu0
        %v1027 = vadd.f32 0.0, %v1026
        %v1028 = vpop.f32.mrf.mxu0
        %v1029 = vadd.f32 0.0, %v1028
        %1030 = vmatmul.bf16.gmra.mxu0 %v701
        %v1031 = vpop.f32.mrf.mxu0
        %v1032 = vadd.f32 0.0, %v1031
        %v1033 = vpop.f32.mrf.mxu0
        %v1034 = vadd.f32 0.0, %v1033
        %1035 = vmatmul.bf16.gmra.mxu0 %v705
        %v1036 = vpop.f32.mrf.mxu0
        %v1037 = vadd.f32 0.0, %v1036
        %v1038 = vpop.f32.mrf.mxu0
        %v1039 = vadd.f32 0.0, %v1038
        %1040 = vmatmul.bf16.gmra.mxu0 %v709
        %v1041 = vpop.f32.mrf.mxu0
        %v1042 = vadd.f32 0.0, %v1041
        %v1043 = vpop.f32.mrf.mxu0
        %v1044 = vadd.f32 0.0, %v1043
        %1045 = vmatmul.bf16.gmra.mxu0 %v713
        %v1046 = vpop.f32.mrf.mxu0
        %v1047 = vadd.f32 0.0, %v1046
        %v1048 = vpop.f32.mrf.mxu0
        %v1049 = vadd.f32 0.0, %v1048
        %1050 = vmatmul.bf16.gmra.mxu0 %v717
        %v1051 = vpop.f32.mrf.mxu0
        %v1052 = vadd.f32 0.0, %v1051
        %v1053 = vpop.f32.mrf.mxu0
        %v1054 = vadd.f32 0.0, %v1053
        %1055 = vmatmul.bf16.gmra.mxu0 %v721
        %v1056 = vpop.f32.mrf.mxu0
        %v1057 = vadd.f32 0.0, %v1056
        %v1058 = vpop.f32.mrf.mxu0
        %v1059 = vadd.f32 0.0, %v1058
        %1060 = vmatmul.bf16.gmra.mxu0 %v725
        %v1061 = vpop.f32.mrf.mxu0
        %v1062 = vadd.f32 0.0, %v1061
        %v1063 = vpop.f32.mrf.mxu0
        %v1064 = vadd.f32 0.0, %v1063
        %1065 = vmatmul.bf16.gmra.mxu0 %v729
        %v1066 = vpop.f32.mrf.mxu0
        %v1067 = vadd.f32 0.0, %v1066
        %v1068 = vpop.f32.mrf.mxu0
        %v1069 = vadd.f32 0.0, %v1068
        %1070 = vmatmul.bf16.gmra.mxu0 %v733
        %v1071 = vpop.f32.mrf.mxu0
        %v1072 = vadd.f32 0.0, %v1071
        %v1073 = vpop.f32.mrf.mxu0
        %v1074 = vadd.f32 0.0, %v1073
        %1075 = vmatmul.bf16.gmra.mxu0 %v737
        %v1076 = vpop.f32.mrf.mxu0
        %v1077 = vadd.f32 0.0, %v1076
        %v1078 = vpop.f32.mrf.mxu0
        %v1079 = vadd.f32 0.0, %v1078
        %1080 = vmatmul.bf16.gmra.mxu0 %v741
        %v1081 = vpop.f32.mrf.mxu0
        %v1082 = vadd.f32 0.0, %v1081
        %v1083 = vpop.f32.mrf.mxu0
        %v1084 = vadd.f32 0.0, %v1083
        %1085 = vmatmul.bf16.gmra.mxu0 %v745
        %v1086 = vpop.f32.mrf.mxu0
        %v1087 = vadd.f32 0.0, %v1086
        %v1088 = vpop.f32.mrf.mxu0
        %v1089 = vadd.f32 0.0, %v1088
        %1090 = vmatmul.bf16.gmra.mxu0 %v749
        %v1091 = vpop.f32.mrf.mxu0
        %v1092 = vadd.f32 0.0, %v1091
        %v1093 = vpop.f32.mrf.mxu0
        %v1094 = vadd.f32 0.0, %v1093
        %1095 = vmatmul.bf16.gmra.mxu0 %v753
        %v1096 = vpop.f32.mrf.mxu0
        %v1097 = vadd.f32 0.0, %v1096
        %v1098 = vpop.f32.mrf.mxu0
        %v1099 = vadd.f32 0.0, %v1098
        %1100 = vmatmul.bf16.gmra.mxu0 %v757
        %v1101 = vpop.f32.mrf.mxu0
        %v1102 = vadd.f32 0.0, %v1101
        %v1103 = vpop.f32.mrf.mxu0
        %v1104 = vadd.f32 0.0, %v1103
        %1105 = vdwg.mxu0
        %1106 = vmatpush.bf16.msra.mxu0 %v968
        %1107 = vmatpush.bf16.msra.mxu0 %v967
        %1108 = vmatpush.bf16.msra.mxu0 %v966
        %1109 = vmatpush.bf16.msra.mxu0 %v965
        %1110 = vmatpush.bf16.msra.mxu0 %v964
        %1111 = vmatpush.bf16.msra.mxu0 %v963
        %1112 = vmatpush.bf16.msra.mxu0 %v962
        %1113 = vmatpush.bf16.msra.mxu0 %v961
        %1114 = vmatmul.bf16.gmra.mxu0 %v698
        %v1115 = vpop.f32.mrf.mxu0
        %v1116 = vadd.f32 %v1027, %v1115
        %v1117 = vpop.f32.mrf.mxu0
        %v1118 = vadd.f32 %v1029, %v1117
        %1119 = vmatmul.bf16.gmra.mxu0 %v702
        %v1120 = vpop.f32.mrf.mxu0
        %v1121 = vadd.f32 %v1032, %v1120
        %v1122 = vpop.f32.mrf.mxu0
        %v1123 = vadd.f32 %v1034, %v1122
        %1124 = vmatmul.bf16.gmra.mxu0 %v706
        %v1125 = vpop.f32.mrf.mxu0
        %v1126 = vadd.f32 %v1037, %v1125
        %v1127 = vpop.f32.mrf.mxu0
        %v1128 = vadd.f32 %v1039, %v1127
        %1129 = vmatmul.bf16.gmra.mxu0 %v710
        %v1130 = vpop.f32.mrf.mxu0
        %v1131 = vadd.f32 %v1042, %v1130
        %v1132 = vpop.f32.mrf.mxu0
        %v1133 = vadd.f32 %v1044, %v1132
        %1134 = vmatmul.bf16.gmra.mxu0 %v714
        %v1135 = vpop.f32.mrf.mxu0
        %v1136 = vadd.f32 %v1047, %v1135
        %v1137 = vpop.f32.mrf.mxu0
        %v1138 = vadd.f32 %v1049, %v1137
        %1139 = vmatmul.bf16.gmra.mxu0 %v718
        %v1140 = vpop.f32.mrf.mxu0
        %v1141 = vadd.f32 %v1052, %v1140
        %v1142 = vpop.f32.mrf.mxu0
        %v1143 = vadd.f32 %v1054, %v1142
        %1144 = vmatmul.bf16.gmra.mxu0 %v722
        %v1145 = vpop.f32.mrf.mxu0
        %v1146 = vadd.f32 %v1057, %v1145
        %v1147 = vpop.f32.mrf.mxu0
        %v1148 = vadd.f32 %v1059, %v1147
        %1149 = vmatmul.bf16.gmra.mxu0 %v726
        %v1150 = vpop.f32.mrf.mxu0
        %v1151 = vadd.f32 %v1062, %v1150
        %v1152 = vpop.f32.mrf.mxu0
        %v1153 = vadd.f32 %v1064, %v1152
        %1154 = vmatmul.bf16.gmra.mxu0 %v730
        %v1155 = vpop.f32.mrf.mxu0
        %v1156 = vadd.f32 %v1067, %v1155
        %v1157 = vpop.f32.mrf.mxu0
        %v1158 = vadd.f32 %v1069, %v1157
        %1159 = vmatmul.bf16.gmra.mxu0 %v734
        %v1160 = vpop.f32.mrf.mxu0
        %v1161 = vadd.f32 %v1072, %v1160
        %v1162 = vpop.f32.mrf.mxu0
        %v1163 = vadd.f32 %v1074, %v1162
        %1164 = vmatmul.bf16.gmra.mxu0 %v738
        %v1165 = vpop.f32.mrf.mxu0
        %v1166 = vadd.f32 %v1077, %v1165
        %v1167 = vpop.f32.mrf.mxu0
        %v1168 = vadd.f32 %v1079, %v1167
        %1169 = vmatmul.bf16.gmra.mxu0 %v742
        %v1170 = vpop.f32.mrf.mxu0
        %v1171 = vadd.f32 %v1082, %v1170
        %v1172 = vpop.f32.mrf.mxu0
        %v1173 = vadd.f32 %v1084, %v1172
        %1174 = vmatmul.bf16.gmra.mxu0 %v746
        %v1175 = vpop.f32.mrf.mxu0
        %v1176 = vadd.f32 %v1087, %v1175
        %v1177 = vpop.f32.mrf.mxu0
        %v1178 = vadd.f32 %v1089, %v1177
        %1179 = vmatmul.bf16.gmra.mxu0 %v750
        %v1180 = vpop.f32.mrf.mxu0
        %v1181 = vadd.f32 %v1092, %v1180
        %v1182 = vpop.f32.mrf.mxu0
        %v1183 = vadd.f32 %v1094, %v1182
        %1184 = vmatmul.bf16.gmra.mxu0 %v754
        %v1185 = vpop.f32.mrf.mxu0
        %v1186 = vadd.f32 %v1097, %v1185
        %v1187 = vpop.f32.mrf.mxu0
        %v1188 = vadd.f32 %v1099, %v1187
        %1189 = vmatmul.bf16.gmra.mxu0 %v758
        %v1190 = vpop.f32.mrf.mxu0
        %v1191 = vadd.f32 %v1102, %v1190
        %v1192 = vpop.f32.mrf.mxu0
        %v1193 = vadd.f32 %v1104, %v1192
        %1194 = vdwg.mxu0
        %1195 = vmatpush.bf16.msra.mxu0 %v976
        %1196 = vmatpush.bf16.msra.mxu0 %v975
        %1197 = vmatpush.bf16.msra.mxu0 %v974
        %1198 = vmatpush.bf16.msra.mxu0 %v973
        %1199 = vmatpush.bf16.msra.mxu0 %v972
        %1200 = vmatpush.bf16.msra.mxu0 %v971
        %1201 = vmatpush.bf16.msra.mxu0 %v970
        %1202 = vmatpush.bf16.msra.mxu0 %v969
        %1203 = vmatmul.bf16.gmra.mxu0 %v699
        %v1204 = vpop.f32.mrf.mxu0
        %v1205 = vadd.f32 %v1116, %v1204
        %v1206 = vpop.f32.mrf.mxu0
        %v1207 = vadd.f32 %v1118, %v1206
        %1208 = vmatmul.bf16.gmra.mxu0 %v703
        %v1209 = vpop.f32.mrf.mxu0
        %v1210 = vadd.f32 %v1121, %v1209
        %v1211 = vpop.f32.mrf.mxu0
        %v1212 = vadd.f32 %v1123, %v1211
        %1213 = vmatmul.bf16.gmra.mxu0 %v707
        %v1214 = vpop.f32.mrf.mxu0
        %v1215 = vadd.f32 %v1126, %v1214
        %v1216 = vpop.f32.mrf.mxu0
        %v1217 = vadd.f32 %v1128, %v1216
        %1218 = vmatmul.bf16.gmra.mxu0 %v711
        %v1219 = vpop.f32.mrf.mxu0
        %v1220 = vadd.f32 %v1131, %v1219
        %v1221 = vpop.f32.mrf.mxu0
        %v1222 = vadd.f32 %v1133, %v1221
        %1223 = vmatmul.bf16.gmra.mxu0 %v715
        %v1224 = vpop.f32.mrf.mxu0
        %v1225 = vadd.f32 %v1136, %v1224
        %v1226 = vpop.f32.mrf.mxu0
        %v1227 = vadd.f32 %v1138, %v1226
        %1228 = vmatmul.bf16.gmra.mxu0 %v719
        %v1229 = vpop.f32.mrf.mxu0
        %v1230 = vadd.f32 %v1141, %v1229
        %v1231 = vpop.f32.mrf.mxu0
        %v1232 = vadd.f32 %v1143, %v1231
        %1233 = vmatmul.bf16.gmra.mxu0 %v723
        %v1234 = vpop.f32.mrf.mxu0
        %v1235 = vadd.f32 %v1146, %v1234
        %v1236 = vpop.f32.mrf.mxu0
        %v1237 = vadd.f32 %v1148, %v1236
        %1238 = vmatmul.bf16.gmra.mxu0 %v727
        %v1239 = vpop.f32.mrf.mxu0
        %v1240 = vadd.f32 %v1151, %v1239
        %v1241 = vpop.f32.mrf.mxu0
        %v1242 = vadd.f32 %v1153, %v1241
        %1243 = vmatmul.bf16.gmra.mxu0 %v731
        %v1244 = vpop.f32.mrf.mxu0
        %v1245 = vadd.f32 %v1156, %v1244
        %v1246 = vpop.f32.mrf.mxu0
        %v1247 = vadd.f32 %v1158, %v1246
        %1248 = vmatmul.bf16.gmra.mxu0 %v735
        %v1249 = vpop.f32.mrf.mxu0
        %v1250 = vadd.f32 %v1161, %v1249
        %v1251 = vpop.f32.mrf.mxu0
        %v1252 = vadd.f32 %v1163, %v1251
        %1253 = vmatmul.bf16.gmra.mxu0 %v739
        %v1254 = vpop.f32.mrf.mxu0
        %v1255 = vadd.f32 %v1166, %v1254
        %v1256 = vpop.f32.mrf.mxu0
        %v1257 = vadd.f32 %v1168, %v1256
        %1258 = vmatmul.bf16.gmra.mxu0 %v743
        %v1259 = vpop.f32.mrf.mxu0
        %v1260 = vadd.f32 %v1171, %v1259
        %v1261 = vpop.f32.mrf.mxu0
        %v1262 = vadd.f32 %v1173, %v1261
        %1263 = vmatmul.bf16.gmra.mxu0 %v747
        %v1264 = vpop.f32.mrf.mxu0
        %v1265 = vadd.f32 %v1176, %v1264
        %v1266 = vpop.f32.mrf.mxu0
        %v1267 = vadd.f32 %v1178, %v1266
        %1268 = vmatmul.bf16.gmra.mxu0 %v751
        %v1269 = vpop.f32.mrf.mxu0
        %v1270 = vadd.f32 %v1181, %v1269
        %v1271 = vpop.f32.mrf.mxu0
        %v1272 = vadd.f32 %v1183, %v1271
        %1273 = vmatmul.bf16.gmra.mxu0 %v755
        %v1274 = vpop.f32.mrf.mxu0
        %v1275 = vadd.f32 %v1186, %v1274
        %v1276 = vpop.f32.mrf.mxu0
        %v1277 = vadd.f32 %v1188, %v1276
        %1278 = vmatmul.bf16.gmra.mxu0 %v759
        %v1279 = vpop.f32.mrf.mxu0
        %v1280 = vadd.f32 %v1191, %v1279
        %v1281 = vpop.f32.mrf.mxu0
        %v1282 = vadd.f32 %v1193, %v1281
        %1283 = vdwg.mxu0
        %1284 = vmatpush.bf16.msra.mxu0 %v984
        %1285 = vmatpush.bf16.msra.mxu0 %v983
        %1286 = vmatpush.bf16.msra.mxu0 %v982
        %1287 = vmatpush.bf16.msra.mxu0 %v981
        %1288 = vmatpush.bf16.msra.mxu0 %v980
        %1289 = vmatpush.bf16.msra.mxu0 %v979
        %1290 = vmatpush.bf16.msra.mxu0 %v978
        %1291 = vmatpush.bf16.msra.mxu0 %v977
        %1292 = vmatmul.bf16.gmra.mxu0 %v700
        %v1293 = vpop.f32.mrf.mxu0
        %v1294 = vadd.f32 %v1205, %v1293
        %v1295 = vpop.f32.mrf.mxu0
        %v1296 = vadd.f32 %v1207, %v1295
        %1297 = vmatmul.bf16.gmra.mxu0 %v704
        %v1298 = vpop.f32.mrf.mxu0
        %v1299 = vadd.f32 %v1210, %v1298
        %v1300 = vpop.f32.mrf.mxu0
        %v1301 = vadd.f32 %v1212, %v1300
        %1302 = vmatmul.bf16.gmra.mxu0 %v708
        %v1303 = vpop.f32.mrf.mxu0
        %v1304 = vadd.f32 %v1215, %v1303
        %v1305 = vpop.f32.mrf.mxu0
        %v1306 = vadd.f32 %v1217, %v1305
        %1307 = vmatmul.bf16.gmra.mxu0 %v712
        %v1308 = vpop.f32.mrf.mxu0
        %v1309 = vadd.f32 %v1220, %v1308
        %v1310 = vpop.f32.mrf.mxu0
        %v1311 = vadd.f32 %v1222, %v1310
        %1312 = vmatmul.bf16.gmra.mxu0 %v716
        %v1313 = vpop.f32.mrf.mxu0
        %v1314 = vadd.f32 %v1225, %v1313
        %v1315 = vpop.f32.mrf.mxu0
        %v1316 = vadd.f32 %v1227, %v1315
        %1317 = vmatmul.bf16.gmra.mxu0 %v720
        %v1318 = vpop.f32.mrf.mxu0
        %v1319 = vadd.f32 %v1230, %v1318
        %v1320 = vpop.f32.mrf.mxu0
        %v1321 = vadd.f32 %v1232, %v1320
        %1322 = vmatmul.bf16.gmra.mxu0 %v724
        %v1323 = vpop.f32.mrf.mxu0
        %v1324 = vadd.f32 %v1235, %v1323
        %v1325 = vpop.f32.mrf.mxu0
        %v1326 = vadd.f32 %v1237, %v1325
        %1327 = vmatmul.bf16.gmra.mxu0 %v728
        %v1328 = vpop.f32.mrf.mxu0
        %v1329 = vadd.f32 %v1240, %v1328
        %v1330 = vpop.f32.mrf.mxu0
        %v1331 = vadd.f32 %v1242, %v1330
        %1332 = vmatmul.bf16.gmra.mxu0 %v732
        %v1333 = vpop.f32.mrf.mxu0
        %v1334 = vadd.f32 %v1245, %v1333
        %v1335 = vpop.f32.mrf.mxu0
        %v1336 = vadd.f32 %v1247, %v1335
        %1337 = vmatmul.bf16.gmra.mxu0 %v736
        %v1338 = vpop.f32.mrf.mxu0
        %v1339 = vadd.f32 %v1250, %v1338
        %v1340 = vpop.f32.mrf.mxu0
        %v1341 = vadd.f32 %v1252, %v1340
        %1342 = vmatmul.bf16.gmra.mxu0 %v740
        %v1343 = vpop.f32.mrf.mxu0
        %v1344 = vadd.f32 %v1255, %v1343
        %v1345 = vpop.f32.mrf.mxu0
        %v1346 = vadd.f32 %v1257, %v1345
        %1347 = vmatmul.bf16.gmra.mxu0 %v744
        %v1348 = vpop.f32.mrf.mxu0
        %v1349 = vadd.f32 %v1260, %v1348
        %v1350 = vpop.f32.mrf.mxu0
        %v1351 = vadd.f32 %v1262, %v1350
        %1352 = vmatmul.bf16.gmra.mxu0 %v748
        %v1353 = vpop.f32.mrf.mxu0
        %v1354 = vadd.f32 %v1265, %v1353
        %v1355 = vpop.f32.mrf.mxu0
        %v1356 = vadd.f32 %v1267, %v1355
        %1357 = vmatmul.bf16.gmra.mxu0 %v752
        %v1358 = vpop.f32.mrf.mxu0
        %v1359 = vadd.f32 %v1270, %v1358
        %v1360 = vpop.f32.mrf.mxu0
        %v1361 = vadd.f32 %v1272, %v1360
        %1362 = vmatmul.bf16.gmra.mxu0 %v756
        %v1363 = vpop.f32.mrf.mxu0
        %v1364 = vadd.f32 %v1275, %v1363
        %v1365 = vpop.f32.mrf.mxu0
        %v1366 = vadd.f32 %v1277, %v1365
        %1367 = vmatmul.bf16.gmra.mxu0 %v760
        %v1368 = vpop.f32.mrf.mxu0
        %v1369 = vadd.f32 %v1280, %v1368
        %v1370 = vpop.f32.mrf.mxu0
        %v1371 = vadd.f32 %v1282, %v1370
        %1372 = vdwg.mxu0
        %v1373 = vadd.f32 %v409, %v1294
        %v1374 = vadd.f32 %v410, %v1296
        %v1375 = vadd.f32 %v411, %v1299
        %v1376 = vadd.f32 %v412, %v1301
        %v1377 = vadd.f32 %v413, %v1304
        %v1378 = vadd.f32 %v414, %v1306
        %v1379 = vadd.f32 %v415, %v1309
        %v1380 = vadd.f32 %v416, %v1311
        %v1381 = vadd.f32 %v417, %v1314
        %v1382 = vadd.f32 %v418, %v1316
        %v1383 = vadd.f32 %v419, %v1319
        %v1384 = vadd.f32 %v420, %v1321
        %v1385 = vadd.f32 %v421, %v1324
        %v1386 = vadd.f32 %v422, %v1326
        %v1387 = vadd.f32 %v423, %v1329
        %v1388 = vadd.f32 %v424, %v1331
        %v1389 = vadd.f32 %v425, %v1334
        %v1390 = vadd.f32 %v426, %v1336
        %v1391 = vadd.f32 %v427, %v1339
        %v1392 = vadd.f32 %v428, %v1341
        %v1393 = vadd.f32 %v429, %v1344
        %v1394 = vadd.f32 %v430, %v1346
        %v1395 = vadd.f32 %v431, %v1349
        %v1396 = vadd.f32 %v432, %v1351
        %v1397 = vadd.f32 %v433, %v1354
        %v1398 = vadd.f32 %v434, %v1356
        %v1399 = vadd.f32 %v435, %v1359
        %v1400 = vadd.f32 %v436, %v1361
        %v1401 = vadd.f32 %v437, %v1364
        %v1402 = vadd.f32 %v438, %v1366
        %v1403 = vadd.f32 %v439, %v1369
        %v1404 = vadd.f32 %v440, %v1371
        %1405 = vst [vmem:[#allocation2] sm:$0xff] %v1373
        %1406 = vst [vmem:[#allocation2 + $0x8] sm:$0xff] %v1374
        %1407 = vst [vmem:[#allocation2 + $0x10] sm:$0xff] %v1375
        %1408 = vst [vmem:[#allocation2 + $0x18] sm:$0xff] %v1376
        %1409 = vst [vmem:[#allocation2 + $0x20] sm:$0xff] %v1377
        %1410 = vst [vmem:[#allocation2 + $0x28] sm:$0xff] %v1378
        %1411 = vst [vmem:[#allocation2 + $0x30] sm:$0xff] %v1379
        %1412 = vst [vmem:[#allocation2 + $0x38] sm:$0xff] %v1380
        %1413 = vst [vmem:[#allocation2 + $0x40] sm:$0xff] %v1381
        %1414 = vst [vmem:[#allocation2 + $0x48] sm:$0xff] %v1382
        %1415 = vst [vmem:[#allocation2 + $0x50] sm:$0xff] %v1383
        %1416 = vst [vmem:[#allocation2 + $0x58] sm:$0xff] %v1384
        %1417 = vst [vmem:[#allocation2 + $0x60] sm:$0xff] %v1385
        %1418 = vst [vmem:[#allocation2 + $0x68] sm:$0xff] %v1386
        %1419 = vst [vmem:[#allocation2 + $0x70] sm:$0xff] %v1387
        %1420 = vst [vmem:[#allocation2 + $0x78] sm:$0xff] %v1388
        %1421 = vst [vmem:[#allocation2 + $0x80] sm:$0xff] %v1389
        %1422 = vst [vmem:[#allocation2 + $0x88] sm:$0xff] %v1390
        %1423 = vst [vmem:[#allocation2 + $0x90] sm:$0xff] %v1391
        %1424 = vst [vmem:[#allocation2 + $0x98] sm:$0xff] %v1392
        %1425 = vst [vmem:[#allocation2 + $0xa0] sm:$0xff] %v1393
        %1426 = vst [vmem:[#allocation2 + $0xa8] sm:$0xff] %v1394
        %1427 = vst [vmem:[#allocation2 + $0xb0] sm:$0xff] %v1395
        %1428 = vst [vmem:[#allocation2 + $0xb8] sm:$0xff] %v1396
        %1429 = vst [vmem:[#allocation2 + $0xc0] sm:$0xff] %v1397
        %1430 = vst [vmem:[#allocation2 + $0xc8] sm:$0xff] %v1398
        %1431 = vst [vmem:[#allocation2 + $0xd0] sm:$0xff] %v1399
        %1432 = vst [vmem:[#allocation2 + $0xd8] sm:$0xff] %v1400
        %1433 = vst [vmem:[#allocation2 + $0xe0] sm:$0xff] %v1401
        %1434 = vst [vmem:[#allocation2 + $0xe8] sm:$0xff] %v1402
        %1435 = vst [vmem:[#allocation2 + $0xf0] sm:$0xff] %v1403
        %1436 = vst [vmem:[#allocation2 + $0xf8] sm:$0xff] %v1404
        // Predicated region
        $region49: #{tpu_custom_call.1} parent=31 // pred_check
          %p1437 = pneg %p277
        $region50: #{tpu_custom_call.1} parent=31 // pred_check_branch
          %1439 = sbr.rel (%p1437) target = $region52
        $region51: #{tpu_custom_call.1} parent=31 // pred_region
          %v1440 = vld [vmem:[#allocation2] sm:$0xff]
          %v1441 = vld [vmem:[#allocation2 + $0x8] sm:$0xff]
          %v1442 = vld [vmem:[#allocation2 + $0x10] sm:$0xff]
          %v1443 = vld [vmem:[#allocation2 + $0x18] sm:$0xff]
          %v1444 = vld [vmem:[#allocation2 + $0x20] sm:$0xff]
          %v1445 = vld [vmem:[#allocation2 + $0x28] sm:$0xff]
          %v1446 = vld [vmem:[#allocation2 + $0x30] sm:$0xff]
          %v1447 = vld [vmem:[#allocation2 + $0x38] sm:$0xff]
          %v1448 = vld [vmem:[#allocation2 + $0x40] sm:$0xff]
          %v1449 = vld [vmem:[#allocation2 + $0x48] sm:$0xff]
          %v1450 = vld [vmem:[#allocation2 + $0x50] sm:$0xff]
          %v1451 = vld [vmem:[#allocation2 + $0x58] sm:$0xff]
          %v1452 = vld [vmem:[#allocation2 + $0x60] sm:$0xff]
          %v1453 = vld [vmem:[#allocation2 + $0x68] sm:$0xff]
          %v1454 = vld [vmem:[#allocation2 + $0x70] sm:$0xff]
          %v1455 = vld [vmem:[#allocation2 + $0x78] sm:$0xff]
          %v1456 = vld [vmem:[#allocation2 + $0x80] sm:$0xff]
          %v1457 = vld [vmem:[#allocation2 + $0x88] sm:$0xff]
          %v1458 = vld [vmem:[#allocation2 + $0x90] sm:$0xff]
          %v1459 = vld [vmem:[#allocation2 + $0x98] sm:$0xff]
          %v1460 = vld [vmem:[#allocation2 + $0xa0] sm:$0xff]
          %v1461 = vld [vmem:[#allocation2 + $0xa8] sm:$0xff]
          %v1462 = vld [vmem:[#allocation2 + $0xb0] sm:$0xff]
          %v1463 = vld [vmem:[#allocation2 + $0xb8] sm:$0xff]
          %v1464 = vld [vmem:[#allocation2 + $0xc0] sm:$0xff]
          %v1465 = vld [vmem:[#allocation2 + $0xc8] sm:$0xff]
          %v1466 = vld [vmem:[#allocation2 + $0xd0] sm:$0xff]
          %v1467 = vld [vmem:[#allocation2 + $0xd8] sm:$0xff]
          %v1468 = vld [vmem:[#allocation2 + $0xe0] sm:$0xff]
          %v1469 = vld [vmem:[#allocation2 + $0xe8] sm:$0xff]
          %v1470 = vld [vmem:[#allocation2 + $0xf0] sm:$0xff]
          %v1471 = vld [vmem:[#allocation2 + $0xf8] sm:$0xff]
          %1472 = vst [vmem:[%s271] sm:$0xff] %v1440
          %1473 = vst [vmem:[%s271 + $0x8] sm:$0xff] %v1441
          %1474 = vst [vmem:[%s271 + $0x10] sm:$0xff] %v1442
          %1475 = vst [vmem:[%s271 + $0x18] sm:$0xff] %v1443
          %1476 = vst [vmem:[%s271 + $0x20] sm:$0xff] %v1444
          %1477 = vst [vmem:[%s271 + $0x28] sm:$0xff] %v1445
          %1478 = vst [vmem:[%s271 + $0x30] sm:$0xff] %v1446
          %1479 = vst [vmem:[%s271 + $0x38] sm:$0xff] %v1447
          %1480 = vst [vmem:[%s271 + $0x40] sm:$0xff] %v1448
          %1481 = vst [vmem:[%s271 + $0x48] sm:$0xff] %v1449
          %1482 = vst [vmem:[%s271 + $0x50] sm:$0xff] %v1450
          %1483 = vst [vmem:[%s271 + $0x58] sm:$0xff] %v1451
          %1484 = vst [vmem:[%s271 + $0x60] sm:$0xff] %v1452
          %1485 = vst [vmem:[%s271 + $0x68] sm:$0xff] %v1453
          %1486 = vst [vmem:[%s271 + $0x70] sm:$0xff] %v1454
          %1487 = vst [vmem:[%s271 + $0x78] sm:$0xff] %v1455
          %1488 = vst [vmem:[%s271 + $0x80] sm:$0xff] %v1456
          %1489 = vst [vmem:[%s271 + $0x88] sm:$0xff] %v1457
          %1490 = vst [vmem:[%s271 + $0x90] sm:$0xff] %v1458
          %1491 = vst [vmem:[%s271 + $0x98] sm:$0xff] %v1459
          %1492 = vst [vmem:[%s271 + $0xa0] sm:$0xff] %v1460
          %1493 = vst [vmem:[%s271 + $0xa8] sm:$0xff] %v1461
          %1494 = vst [vmem:[%s271 + $0xb0] sm:$0xff] %v1462
          %1495 = vst [vmem:[%s271 + $0xb8] sm:$0xff] %v1463
          %1496 = vst [vmem:[%s271 + $0xc0] sm:$0xff] %v1464
          %1497 = vst [vmem:[%s271 + $0xc8] sm:$0xff] %v1465
          %1498 = vst [vmem:[%s271 + $0xd0] sm:$0xff] %v1466
          %1499 = vst [vmem:[%s271 + $0xd8] sm:$0xff] %v1467
          %1500 = vst [vmem:[%s271 + $0xe0] sm:$0xff] %v1468
          %1501 = vst [vmem:[%s271 + $0xe8] sm:$0xff] %v1469
          %1502 = vst [vmem:[%s271 + $0xf0] sm:$0xff] %v1470
          %1503 = vst [vmem:[%s271 + $0xf8] sm:$0xff] %v1471
        $region52: #{tpu_custom_call.1} parent=31 // pred_fallthru
          _
        %s1504 = sand.u32 %s121, 1
        %s1505 = scalar_lea.sflag [#allocation5], %s1504
        %s1506 = sand.u32 %s121, 1
        %s1507 = smul.addr %s1506, 256
        %s1508 = scalar_lea.vmem [#allocation9], %s1507
        // Predicated region
        $region53: #{tpu_custom_call.1} parent=31 // pred_check
          %p1509 = pneg %p131
        $region54: #{tpu_custom_call.1} parent=31 // pred_check_branch
          %1511 = sbr.rel (%p1509) target = $region56
        $region55: #{tpu_custom_call.1} parent=31 // pred_region
          %s1512 = smul.u32 32, %s25
          %1514 = vsyncadd %s1505, 0
          %s1515 = smul.addr %s1512, 8
          %s1516 = scalar_lea.hbm %s3, %s1515
          %s1517 = sshll.u32 %s1508, 4
          %s1518 = int_to_ptr.vmem [resolvable:$true] %s1517
          %s1519 = sshll.u32 %s1516, 4
          %s1520 = int_to_ptr.hbm [resolvable:$true] %s1519
          %1525 = dma.vmem_to_hbm [thread:$0]  %s1518, 4096, %s1520, %s1505, 128, 128, 8
        $region56: #{tpu_custom_call.1} parent=31 // pred_fallthru
          _
      $region32: #{tpu_custom_call.1} parent=5 // pred_fallthru
        _
      %p1526 = scmp.le.s32.totalorder 2, %s16
      // Predicated region
      $region57: #{tpu_custom_call.1} parent=5 // pred_check
        %p1527 = pneg %p1526
      $region58: #{tpu_custom_call.1} parent=5 // pred_check_branch
        %1529 = sbr.rel (%p1527) target = $region60
      $region59: #{tpu_custom_call.1} parent=5 // pred_region
        %s1530 = ssub.s32 %s16, 2
        // Predicated region
        $region61: #{tpu_custom_call.1} parent=59 // pred_check
          %p1531 = pneg %p137
        $region62: #{tpu_custom_call.1} parent=59 // pred_check_branch
          %1533 = sbr.rel (%p1531) target = $region64
        $region63: #{tpu_custom_call.1} parent=59 // pred_region
          %s1534 = sand.u32 %s122, 1
          %s1535 = scalar_lea.sflag [#allocation5], %s1534
          %s1536 = sand.u32 %s122, 1
          %s1537 = smul.addr %s1536, 256
          %s1538 = scalar_lea.vmem [#allocation9], %s1537
          %1540 = dma.done %s1535, 4096
        $region64: #{tpu_custom_call.1} parent=59 // pred_fallthru
          _
      $region60: #{tpu_custom_call.1} parent=5 // pred_fallthru
        _
    $region6: #{tpu_custom_call.1} parent=1 // loop_footer
      %s20 = sadd.s32 1, %s16
    $region7: #{tpu_custom_call.1} parent=1 // loop_footer_branch
      %15 = sbr.rel target = $region3
    $region8: #{tpu_custom_call.1} parent=1 // loop_exit
      _
    %1541 = vsyncpa [#allocation4], 1
    %s1542 = scalar_lea.sflag [#allocation4], 1
    %1543 = vsyncpa %s1542, 1
    %1544 = vsyncpa [#allocation7], 1
    %1545 = vsyncpa [#allocation5], 1
    %s1546 = scalar_lea.sflag [#allocation5], 1
    %1547 = vsyncpa %s1546, 1

</llo_original>
